<compile_context>
chip_gen: v6e
topology: v6e:2x2x1
jax: 0.10.0
libtpu: 0.0.40
codegen_flags: <defaults>
</compile_context>

<pallas_src>
import math

import jax
import jax.numpy as jnp
from jax import lax
from jax.experimental import pallas as pl
from jax.experimental.pallas import tpu as pltpu


_LANE = 128
_MAX_STATIC_CHUNKS = 32   # fully unroll chunk adds up to this count
_INNER_UNROLL = 8         # chunks per fori_loop iteration beyond that


def _vmem_capacity_bytes():
    """Per-core VMEM capacity; conservative fallback = 64 MiB (v7x)."""
    try:
        info = pltpu.get_tpu_info()
        for name in ("vmem_capacity_bytes", "vmem_bytes", "vmem_size_bytes"):
            v = getattr(info, name, None)
            if v:
                v = int(v)
                if v >= (8 << 20):
                    return v
    except Exception:
        pass
    return 64 << 20


def _choose_tiles(B, C_in, HW, itemsize, block_budget):
    """Pick (b_tile, hw_tile).

    Row blocks hold whole batch elements (row_tile = b_tile * C_in) and are
    either a multiple of 8 rows or the full row dim.  We prefer >=2 row
    blocks (megacore) when divisibility allows.  hw_tile is the whole HW if
    it fits the byte budget, else the largest lane-aligned width that does.
    """
    g = 8 // math.gcd(8, C_in)          # smallest batch granule with 8-aligned rows
    ROW_CAP = 1024                      # keep row_tile moderate so hw_tile stays wide
    b_tile = B
    if B % g == 0 and B // g >= 2:
        cands = [bt for bt in range(g, B // 2 + 1, g)
                 if B % bt == 0 and bt * C_in <= ROW_CAP]
        if cands:
            b_tile = max(cands)
    row_tile = b_tile * C_in

    if row_tile * HW * itemsize <= block_budget:
        hw_tile = HW                                   # single full block, never ragged
    else:
        lanes = block_budget // (row_tile * itemsize)
        lanes = max(512, (lanes // _LANE) * _LANE)     # lane-aligned, >=512 for DMA eff.
        hw_tile = min(lanes, ((HW + _LANE - 1) // _LANE) * _LANE)
        if hw_tile >= HW:
            hw_tile = HW
    return b_tile, hw_tile


def _build_kernel(*, b_tile, C_in, hidden_planes, K, C, HW, hw_tile, acc_w, ragged):
    row_tile = b_tile * C_in
    KC = K * C
    n_fold = hw_tile // acc_w
    inv_hw = 1.0 / float(HW)
    inv_scale = 1.0 / (hidden_planes ** 0.5)

    def kernel(x_ref, w1t_ref, w2t_ref, b2_ref, o_ref, acc_ref):
        hw = pl.program_id(1)
        n_hw = pl.num_programs(1)

        # ---- init lane-wide accumulator at the first HW block --------------
        @pl.when(hw == 0)
        def _():
            acc_ref[...] = jnp.zeros_like(acc_ref)

        # ---- streaming spatial sum: pure VPU adds over lane chunks ---------
        if ragged:
            lane_iota = lax.broadcasted_iota(jnp.int32, (row_tile, acc_w), 1)
            col0 = hw * hw_tile

        def add_chunk(acc, start):
            v = x_ref[:, pl.ds(start, acc_w)].astype(jnp.float32)
            if ragged:
                col = col0 + start + lane_iota
                v = jnp.where(col < HW, v, 0.0)        # zero out-of-range lanes
            return acc + v

        acc = acc_ref[...]
        if n_fold <= _MAX_STATIC_CHUNKS:
            for c in range(n_fold):                    # fully unrolled
                acc = add_chunk(acc, c * acc_w)
        else:
            n_major = n_fold // _INNER_UNROLL

            def body(m, a):
                base = m * (_INNER_UNROLL * acc_w)
                for j in range(_INNER_UNROLL):
                    a = add_chunk(a, pl.multiple_of(base + j * acc_w, acc_w))
                return a

            acc = lax.fori_loop(0, n_major, body, acc)
            for c in range(n_major * _INNER_UNROLL, n_fold):
                acc = add_chunk(acc, c * acc_w)
        acc_ref[...] = acc

        # ---- epilogue: once per row block, after the last HW tile ----------
        @pl.when(hw == n_hw - 1)
        def _():
            # single deferred cross-lane reduce, then divide by the true H*W
            pooled = jnp.sum(acc_ref[...], axis=-1, keepdims=True) * inv_hw
            pooled = pooled.reshape(b_tile, C_in)              # rows -> (batch, C_in)

            # fc1: 1x1 conv, no bias
            y1 = jnp.dot(pooled, w1t_ref[...], preferred_element_type=jnp.float32)
            y1 = jnp.maximum(y1, 0.0)                          # ReLU
            # fc2: 1x1 conv with bias
            y2 = jnp.dot(y1, w2t_ref[...], preferred_element_type=jnp.float32)
            y2 = y2 + b2_ref[...]                              # (1, K*C) broadcasts

            # view(B, K, C), scale by 1/sqrt(hidden), softmax over K
            z = y2.reshape(b_tile, K, C) * inv_scale
            z = z - jnp.max(z, axis=1, keepdims=True)
            e = jnp.exp(z)
            p = e / jnp.sum(e, axis=1, keepdims=True)

            o_ref[...] = p.reshape(1, b_tile, KC).astype(o_ref.dtype)

    return kernel


def se_module_forward(x_nchw, w1, w2, b2, hidden_planes, K, C,
                      *, block_budget_bytes=None):
    """x_nchw: (B, C_in, H, W); w1: (hidden, C_in); w2: (C*K, hidden); b2: (C*K,)."""
    B, C_in, H, W = x_nchw.shape
    HW = H * W
    KC = K * C
    assert w1.shape == (hidden_planes, C_in)
    assert w2.shape == (KC, hidden_planes)

    # Free, copy-less 2D layout: rows = B*C_in, lanes = flattened H*W.
    x2 = x_nchw.reshape(B * C_in, HW)
    itemsize = x2.dtype.itemsize

    vmem = _vmem_capacity_bytes()
    if block_budget_bytes is None:
        # ~12-16 MiB blocks on v7x (64 MiB VMEM), ~25 MiB on v5e/v6e (128 MiB).
        block_budget_bytes = max(4 << 20, min(32 << 20, vmem // 5))

    b_tile, hw_tile = _choose_tiles(B, C_in, HW, itemsize, block_budget_bytes)
    row_tile = b_tile * C_in
    n_row = B // b_tile
    n_hw = pl.cdiv(HW, hw_tile)
    ragged = (HW % hw_tile) != 0
    acc_w = _LANE if (hw_tile % _LANE == 0) else hw_tile   # non-128 only if single block

    w1t = jnp.transpose(w1).astype(jnp.float32)             # (C_in, hidden)
    w2t = jnp.transpose(w2).astype(jnp.float32)             # (hidden, K*C)
    b2r = jnp.asarray(b2).reshape(1, KC).astype(jnp.float32)
    hidden = hidden_planes

    kernel = _build_kernel(b_tile=b_tile, C_in=C_in, hidden_planes=hidden_planes,
                           K=K, C=C, HW=HW, hw_tile=hw_tile, acc_w=acc_w,
                           ragged=ragged)

    block_bytes = row_tile * hw_tile * itemsize
    vmem_limit = int(min(vmem * 3 // 4, 2 * block_bytes + (16 << 20)))

    out = pl.pallas_call(
        kernel,
        out_shape=jax.ShapeDtypeStruct((n_row, b_tile, KC), jnp.float32),
        grid_spec=pltpu.PrefetchScalarGridSpec(
            num_scalar_prefetch=0,
            grid=(n_row, n_hw),                    # HW (reduction) axis is innermost
            in_specs=[
                # x: (row block, HW tile); rows are whole batches, lane-dense
                pl.BlockSpec((row_tile, hw_tile), lambda b, hw: (b, hw)),
                # weights / bias: tiny, resident (constant block index)
                pl.BlockSpec((C_in, hidden), lambda b, hw: (0, 0)),
                pl.BlockSpec((hidden, KC), lambda b, hw: (0, 0)),
                pl.BlockSpec((1, KC), lambda b, hw: (0, 0)),
            ],
            # 3D output so the block's last two dims equal the full array dims
            out_specs=pl.BlockSpec((1, b_tile, KC), lambda b, hw: (b, 0, 0)),
            scratch_shapes=[pltpu.VMEM((row_tile, acc_w), jnp.float32)],
        ),
        compiler_params=pltpu.CompilerParams(
            dimension_semantics=("parallel", "arbitrary"),
            vmem_limit_bytes=vmem_limit,
        ),
    )(x2, w1t, w2t, b2r)

    return out.reshape(B, K, C)


def se_module_reference(x_nchw, w1, w2, b2, hidden_planes, K, C):
    pooled = jnp.mean(x_nchw.astype(jnp.float32), axis=(2, 3))        # (B, C_in)
    y1 = jnp.maximum(pooled @ w1.T.astype(jnp.float32), 0.0)          # (B, hidden)
    y2 = y1 @ w2.T.astype(jnp.float32) + b2                           # (B, C*K)
    z = y2.reshape(y2.shape[0], K, C) / (hidden_planes ** 0.5)
    return jax.nn.softmax(z, axis=1)


def _run_case(case_idx, B, C_in, H, W, C, K, *, ratios=0.25,
              dtype=jnp.float32, block_budget_bytes=None):
    hidden_planes = int(C_in * ratios) + 1
    key = jax.random.fold_in(jax.random.PRNGKey(0), case_idx)
    kx, k1, k2 = jax.random.split(key, 3)

    x = jax.random.normal(kx, (B, C_in, H, W), dtype=jnp.float32).astype(dtype)
    # kaiming_normal(mode='fan_out', relu) style init; bias = 0.
    std1 = (2.0 / hidden_planes) ** 0.5
    std2 = (2.0 / (C * K)) ** 0.5
    w1 = std1 * jax.random.normal(k1, (hidden_planes, C_in), dtype=jnp.float32)
    w2 = std2 * jax.random.normal(k2, (C * K, hidden_planes), dtype=jnp.float32)
    b2 = jnp.zeros((C * K,), dtype=jnp.float32)

    out = se_module_forward(x, w1, w2, b2, hidden_planes, K, C,
                            block_budget_bytes=block_budget_bytes)
    out = jax.block_until_ready(out)

    ref = se_module_reference(x.astype(jnp.float32), w1, w2, b2, hidden_planes, K, C)
    assert out.shape == (B, K, C), (out.shape, (B, K, C))
    assert jnp.allclose(out, ref, atol=1e-4, rtol=1e-4), f"mismatch in case {case_idx}"


if __name__ == "__main__":
    # Case 0: the module's nominal small shape (single HW block, 1 row block).
    _run_case(0, B=2, C_in=4, H=16, W=16, C=4, K=4)
    # Case 1: ragged HW + multiple HW blocks (static-unrolled chunk path),
    # bf16 activations streamed and accumulated in f32.
    _run_case(1, B=2, C_in=4, H=50, W=100, C=4, K=4,
              dtype=jnp.bfloat16, block_budget_bytes=64 * 1024)
    # Case 2: ragged HW with a long chunk chain (fori_loop chunk path).
    _run_case(2, B=2, C_in=4, H=100, W=100, C=4, K=4,
              block_budget_bytes=256 * 1024)
    # Case 3: multiple row blocks (megacore "parallel" axis), odd H*W=49.
    _run_case(3, B=16, C_in=8, H=7, W=7, C=4, K=4)

    print("KERNEL_OK")
</pallas_src>

<mosaic_0001>
module attributes {stable_mosaic.version = 11 : i64} {
  func.func @kernel(%arg0: i32, %arg1: i32, %arg2: memref<8x256xf32, #tpu.memory_space<vmem>>, %arg3: memref<4x2xf32, #tpu.memory_space<vmem>>, %arg4: memref<2x16xf32, #tpu.memory_space<vmem>>, %arg5: memref<1x16xf32, #tpu.memory_space<vmem>>, %arg6: memref<1x2x16xf32, #tpu.memory_space<vmem>>, %arg7: memref<8x128xf32, #tpu.memory_space<vmem>>) attributes {dimension_semantics = [#tpu.dimension_semantics<parallel>, #tpu.dimension_semantics<arbitrary>], iteration_bounds = array<i64: 1, 1>, scalar_prefetch = 0 : i64, scratch_operands = 1 : i64, tpu.core_type = #tpu.core_type<tc>, window_params = [{transform_indices = @transform_0, window_bounds = array<i64: 8, 256>}, {pipeline_mode = #tpu.pipeline_mode<synchronous>, transform_indices = @transform_1, window_bounds = array<i64: 4, 2>}, {pipeline_mode = #tpu.pipeline_mode<synchronous>, transform_indices = @transform_2, window_bounds = array<i64: 2, 16>}, {pipeline_mode = #tpu.pipeline_mode<synchronous>, transform_indices = @transform_3, window_bounds = array<i64: 1, 16>}, {transform_indices = @transform_4, window_bounds = array<i64: 1, 2, 16>}]} {
    %c0_i32 = arith.constant 0 : i32
    %0 = arith.cmpi eq, %arg1, %c0_i32 : i32
    %1 = arith.extui %0 : i1 to i32
    %c0_i32_0 = arith.constant 0 : i32
    %2 = arith.cmpi ne, %1, %c0_i32_0 : i32
    scf.if %2 {
      %cst = arith.constant 0.000000e+00 : f32
      %12 = vector.broadcast %cst : f32 to vector<8x128xf32>
      %c0_9 = arith.constant 0 : index
      %c0_10 = arith.constant 0 : index
      %13 = vector.load %arg7[%c0_9, %c0_10] : memref<8x128xf32, #tpu.memory_space<vmem>>, vector<8x128xf32>
      tpu.vector_store %arg7[%c0_9, %c0_10], %12 {strides = array<i32>} : memref<8x128xf32, #tpu.memory_space<vmem>>, vector<8x128xf32>,
    } else {
    }
    %c0 = arith.constant 0 : index
    %c0_1 = arith.constant 0 : index
    %3 = vector.load %arg7[%c0, %c0_1] : memref<8x128xf32, #tpu.memory_space<vmem>>, vector<8x128xf32>
    %c0_2 = arith.constant 0 : index
    %c0_3 = arith.constant 0 : index
    %4 = vector.load %arg2[%c0_2, %c0_3] : memref<8x256xf32, #tpu.memory_space<vmem>>, vector<8x128xf32>
    %5 = arith.addf %3, %4 : vector<8x128xf32>
    %c0_4 = arith.constant 0 : index
    %c128 = arith.constant 128 : index
    %6 = vector.load %arg2[%c0_4, %c128] : memref<8x256xf32, #tpu.memory_space<vmem>>, vector<8x128xf32>
    %7 = arith.addf %5, %6 : vector<8x128xf32>
    %c0_5 = arith.constant 0 : index
    %c0_6 = arith.constant 0 : index
    %8 = vector.load %arg7[%c0_5, %c0_6] : memref<8x128xf32, #tpu.memory_space<vmem>>, vector<8x128xf32>
    tpu.vector_store %arg7[%c0_5, %c0_6], %7 {strides = array<i32>} : memref<8x128xf32, #tpu.memory_space<vmem>>, vector<8x128xf32>,
    %c0_i32_7 = arith.constant 0 : i32
    %9 = arith.cmpi eq, %arg1, %c0_i32_7 : i32
    %10 = arith.extui %9 : i1 to i32
    %c0_i32_8 = arith.constant 0 : i32
    %11 = arith.cmpi ne, %10, %c0_i32_8 : i32
    scf.if %11 {
      %c0_9 = arith.constant 0 : index
      %c0_10 = arith.constant 0 : index
      %12 = vector.load %arg7[%c0_9, %c0_10] : memref<8x128xf32, #tpu.memory_space<vmem>>, vector<8x128xf32>
      %cst = arith.constant dense<0.000000e+00> : vector<8xf32>
      %13 = vector.multi_reduction <add>, %12, %cst [1] : vector<8x128xf32> to vector<8xf32>
      %14 = vector.shape_cast %13 : vector<8xf32> to vector<8x1xf32>
      %cst_11 = arith.constant 3.906250e-03 : f32
      %15 = vector.broadcast %cst_11 : f32 to vector<8x1xf32>
      %16 = arith.mulf %14, %15 : vector<8x1xf32>
      %17 = vector.shape_cast %16 : vector<8x1xf32> to vector<2x4xf32>
      %c0_12 = arith.constant 0 : index
      %c0_13 = arith.constant 0 : index
      %18 = vector.load %arg3[%c0_12, %c0_13] : memref<4x2xf32, #tpu.memory_space<vmem>>, vector<4x2xf32>
      %cst_14 = arith.constant dense<0.000000e+00> : vector<2x2xf32>
      %19 = tpu.matmul %17, %18, %cst_14 {dimension_numbers = #tpu.dot_dimension_numbers<[1], [0], [0], [1], [0, 0, 1, 1], [], []>} : vector<2x4xf32>, vector<4x2xf32>, vector<2x2xf32> -> vector<2x2xf32>
      %cst_15 = arith.constant 0.000000e+00 : f32
      %20 = vector.broadcast %cst_15 : f32 to vector<2x2xf32>
      %21 = arith.maximumf %19, %20 : vector<2x2xf32>
      %c0_16 = arith.constant 0 : index
      %c0_17 = arith.constant 0 : index
      %22 = vector.load %arg4[%c0_16, %c0_17] : memref<2x16xf32, #tpu.memory_space<vmem>>, vector<2x16xf32>
      %cst_18 = arith.constant dense<0.000000e+00> : vector<2x16xf32>
      %23 = tpu.matmul %21, %22, %cst_18 {dimension_numbers = #tpu.dot_dimension_numbers<[1], [0], [0], [1], [0, 0, 1, 1], [], []>} : vector<2x2xf32>, vector<2x16xf32>, vector<2x16xf32> -> vector<2x16xf32>
      %c0_19 = arith.constant 0 : index
      %c0_20 = arith.constant 0 : index
      %24 = vector.load %arg5[%c0_19, %c0_20] : memref<1x16xf32, #tpu.memory_space<vmem>>, vector<1x16xf32>
      %25 = vector.broadcast %24 : vector<1x16xf32> to vector<2x16xf32>
      %26 = arith.addf %23, %25 : vector<2x16xf32>
      %27 = vector.shape_cast %26 : vector<2x16xf32> to vector<2x4x4xf32>
      %cst_21 = arith.constant 0.707106769 : f32
      %28 = vector.broadcast %cst_21 : f32 to vector<2x4x4xf32>
      %29 = arith.mulf %27, %28 : vector<2x4x4xf32>
      %cst_22 = arith.constant dense<0xFF800000> : vector<2x4xf32>
      %30 = vector.multi_reduction <maximumf>, %29, %cst_22 [1] : vector<2x4x4xf32> to vector<2x4xf32>
      %31 = vector.shape_cast %30 : vector<2x4xf32> to vector<2x1x4xf32>
      %32 = vector.broadcast %31 : vector<2x1x4xf32> to vector<2x4x4xf32>
      %33 = arith.subf %29, %32 : vector<2x4x4xf32>
      %34 = math.exp %33 : vector<2x4x4xf32>
      %cst_23 = arith.constant dense<0.000000e+00> : vector<2x4xf32>
      %35 = vector.multi_reduction <add>, %34, %cst_23 [1] : vector<2x4x4xf32> to vector<2x4xf32>
      %36 = vector.shape_cast %35 : vector<2x4xf32> to vector<2x1x4xf32>
      %37 = vector.broadcast %36 : vector<2x1x4xf32> to vector<2x4x4xf32>
      %38 = arith.divf %34, %37 : vector<2x4x4xf32>
      %39 = vector.shape_cast %38 : vector<2x4x4xf32> to vector<1x2x16xf32>
      %c0_24 = arith.constant 0 : index
      %c0_25 = arith.constant 0 : index
      %c0_26 = arith.constant 0 : index
      %40 = vector.load %arg6[%c0_24, %c0_25, %c0_26] : memref<1x2x16xf32, #tpu.memory_space<vmem>>, vector<1x2x16xf32>
      tpu.vector_store %arg6[%c0_24, %c0_25, %c0_26], %39 {strides = array<i32>} : memref<1x2x16xf32, #tpu.memory_space<vmem>>, vector<1x2x16xf32>,
    } else {
    }
    return
  }
  func.func @transform_0(%arg0: i32, %arg1: i32) -> (i32, i32) {
    %c0_i32 = arith.constant 0 : i32
    return %arg0, %arg1 : i32, i32
  }
  func.func @transform_1(%arg0: i32, %arg1: i32) -> (i32, i32) {
    %c0_i32 = arith.constant 0 : i32
    %c0_i32_0 = arith.constant 0 : i32
    %c0_i32_1 = arith.constant 0 : i32
    return %c0_i32, %c0_i32_0 : i32, i32
  }
  func.func @transform_2(%arg0: i32, %arg1: i32) -> (i32, i32) {
    %c0_i32 = arith.constant 0 : i32
    %c0_i32_0 = arith.constant 0 : i32
    %c0_i32_1 = arith.constant 0 : i32
    return %c0_i32, %c0_i32_0 : i32, i32
  }
  func.func @transform_3(%arg0: i32, %arg1: i32) -> (i32, i32) {
    %c0_i32 = arith.constant 0 : i32
    %c0_i32_0 = arith.constant 0 : i32
    %c0_i32_1 = arith.constant 0 : i32
    return %c0_i32, %c0_i32_0 : i32, i32
  }
  func.func @transform_4(%arg0: i32, %arg1: i32) -> (i32, i32, i32) {
    %c0_i32 = arith.constant 0 : i32
    %c0_i32_0 = arith.constant 0 : i32
    %c0_i32_1 = arith.constant 0 : i32
    return %arg0, %c0_i32, %c0_i32_0 : i32, i32, i32
  }
}

</mosaic_0001>

<llo_original>
// kernel: tpu_custom_call.1
$region0: #{tpu_custom_call.1}
  #allocation0 [shape = 'u32[]', space=smem, size = 0x4, offset = 0x4, fixed_abs, tag = 'smem constant byte address 0x4 - core index']
  #allocation1 [shape = 'u32[144,128]{1,0:T(1,128)}', space=vmem, size = 0x12000, scoped, tag = 'internal scratch']
  #allocation2 [shape = 'f32[8,128]{1,0:T(8,128)}', space=vmem, size = 0x1000, scoped, tag = 'scratch operand']
  %s0 = inlined_call_operand.hbm [shape: f32[8,256], index: 0, kind: input, shape index: {}]
  %s1 = inlined_call_operand.vmem [shape: f32[4,2], index: 1, kind: input, shape index: {}]
  %s2 = inlined_call_operand.vmem [shape: f32[2,16], index: 2, kind: input, shape index: {}]
  %s3 = inlined_call_operand.vmem [shape: f32[1,16], index: 3, kind: input, shape index: {}]
  %s4 = inlined_call_operand.hbm [shape: f32[1,2,16], index: 4, kind: output, shape index: {}]
  %s5 = sld [smem:[#allocation0]]
  $region38: #{tpu_custom_call.1} parent=0
    _
  %s7 = ssub.s32 1, %s5
  %s8 = scalar_select 0, %s7, %s5
  $region1: #{tpu_custom_call.1} parent=0
    #allocation3 [shape = 'u8[8192]{0}', space=vmem, size = 0x2000, scoped, tag = 'input window, operand 0, single buffered']
    #allocation4 [shape = 's32[1]{0}', space=sflag, size = 0x4, scoped, tag = 'scoped memory for tpu_custom_call.1']
    #allocation5 [shape = 's32[1]{0}', space=sflag, size = 0x4, scoped, tag = 'scoped memory for tpu_custom_call.1']
    #allocation6 [shape = 'u8[1024]{0}', space=vmem, size = 0x400, scoped, tag = 'output window, operand 0, single buffered']
    %9 = vsyncpa [#allocation4], 0
    %10 = vsyncpa [#allocation5], 0
    // Predicated region
    $region2: #{tpu_custom_call.1} parent=1 // pred_check
      _
    $region3: #{tpu_custom_call.1} parent=1 // pred_check_branch
      %12 = sbr.rel (0) target = $region5
    $region4: #{tpu_custom_call.1} parent=1 // pred_region
      %s14 = ssub.s32 256, 256
      %15 = vsyncadd [#allocation4], %s14
      %s17 = sshll.u32 [#allocation3], 4
      %s18 = int_to_ptr.vmem [resolvable:$true] %s17
      %20 = dma.hbm_to_vmem [thread:$0]  %s0, 256, %s18, [#allocation4]
    $region5: #{tpu_custom_call.1} parent=1 // pred_fallthru
      _
    // Predicated region
    $region6: #{tpu_custom_call.1} parent=1 // pred_check
      _
    $region7: #{tpu_custom_call.1} parent=1 // pred_check_branch
      %22 = sbr.rel (0) target = $region9
    $region8: #{tpu_custom_call.1} parent=1 // pred_region
      _
    $region9: #{tpu_custom_call.1} parent=1 // pred_fallthru
      _
    // Predicated region
    $region10: #{tpu_custom_call.1} parent=1 // pred_check
      _
    $region11: #{tpu_custom_call.1} parent=1 // pred_check_branch
      %24 = sbr.rel (0) target = $region13
    $region12: #{tpu_custom_call.1} parent=1 // pred_region
      _
    $region13: #{tpu_custom_call.1} parent=1 // pred_fallthru
      _
    // Predicated region
    $region14: #{tpu_custom_call.1} parent=1 // pred_check
      _
    $region15: #{tpu_custom_call.1} parent=1 // pred_check_branch
      %26 = sbr.rel (0) target = $region17
    $region16: #{tpu_custom_call.1} parent=1 // pred_region
      _
    $region17: #{tpu_custom_call.1} parent=1 // pred_fallthru
      _
    // Predicated region
    $region18: #{tpu_custom_call.1} parent=1 // pred_check
      _
    $region19: #{tpu_custom_call.1} parent=1 // pred_check_branch
      %28 = sbr.rel (0) target = $region21
    $region20: #{tpu_custom_call.1} parent=1 // pred_region
      %29 = dma.done [#allocation4], 256
    $region21: #{tpu_custom_call.1} parent=1 // pred_fallthru
      _
    %p30 = scmp.eq.s32.totalorder 0, 0
    // Predicated region
    $region22: #{tpu_custom_call.1} parent=1 // pred_check
      %p31 = pneg %p30
    $region23: #{tpu_custom_call.1} parent=1 // pred_check_branch
      %33 = sbr.rel (%p31) target = $region25
    $region24: #{tpu_custom_call.1} parent=1 // pred_region
      %34 = vst [vmem:[#allocation2] sm:$0xff] 0.0
    $region25: #{tpu_custom_call.1} parent=1 // pred_fallthru
      _
    %v35 = vld [vmem:[#allocation2] sm:$0xff]
    %v36 = vld [vmem:[#allocation3] sm:$0xff]
    %v37 = vadd.f32 %v35, %v36
    %v38 = vld [vmem:[#allocation3 + $0x8] sm:$0xff]
    %v39 = vadd.f32 %v37, %v38
    %40 = vst [vmem:[#allocation2] sm:$0xff] %v39
    // Predicated region
    $region26: #{tpu_custom_call.1} parent=1 // pred_check
      %p41 = pneg %p30
    $region27: #{tpu_custom_call.1} parent=1 // pred_check_branch
      %43 = sbr.rel (%p41) target = $region29
    $region28: #{tpu_custom_call.1} parent=1 // pred_region
      %v44 = vld [vmem:[#allocation2] sm:$0xff]
      %45 = vadd.xlane.f32.xlu0 %v44
      %v46 = vpop.xlane.xlu0 %45
      %v47 = vmul.f32 %v46, 0.00390625
      %v50 = vunpack.c.l.s4 839922192
      %v51 = vunpack.c.0.s8 %v50
      %v52 = vlaneseq
      %v53 = vshrl.u32 %v52, 7
      %v54 = vsub.s32 %v51, %v53
      %v55 = vrot.slane %v47, %v54
      %v57 = vunpack.c.l.s4 1985246804
      %v58 = vunpack.c.0.s8 %v57
      %v59 = vlaneseq
      %v60 = vshrl.u32 %v59, 7
      %v61 = vsub.s32 %v58, %v60
      %v62 = vrot.slane %v47, %v61
      %v63 = vld [vmem:[%s1] sm:$0xf]
      %64 = vset.pattern.permute.xlu0 0
      %65 = vperm.xlu0 %64, %v55
      %v66 = vpop.permute.xlu0 %65
      %67 = vset.pattern.permute.xlu0 0
      %68 = vperm.xlu0 %67, %v62
      %v69 = vpop.permute.xlu0 %68
      %v70 = vlaneseq
      %v71 = vand.u32 %v70, 127
      %v72 = vlaneseq
      %v73 = vshrl.u32 %v72, 7
      %v74 = vsub.s32 %v71, %v73
      %v75 = vrot.slane %v66, %v74
      %v76 = vlaneseq
      %v77 = vshrl.u32 %v76, 7
      %v78 = vsub.s32 %v71, %v77
      %v79 = vrot.slane %v69, %v78
      %vm80 = vcmask 1041409
      %v81 = vsel %vm80, %v79, %v75
      %vm82 = vcmask 31744
      %v83 = vsel %vm82, %v81, 0
      %vm85 = vcmask 1043456
      %v87 = vsel %vm85, %v63, 0
      %89 = vmatprep.subr.mxu0 0.0
      %90 = vmatpush1.msra.mxu0 0.0
      %91 = vmatprep.subr.mxu0 0.0
      %92 = vmatpush1.msra.mxu0 0.0
      %93 = vmatprep.subr.mxu0 0.0
      %94 = vmatpush1.msra.mxu0 0.0
      %95 = vmatprep.subr.mxu0 0.0
      %96 = vmatpush1.msra.mxu0 0.0
      %97 = vmatprep.subr.mxu0 0.0
      %98 = vmatpush1.msra.mxu0 0.0
      %99 = vmatprep.subr.mxu0 0.0
      %100 = vmatpush1.msra.mxu0 0.0
      %101 = vmatprep.subr.mxu0 0.0
      %102 = vmatpush1.msra.mxu0 0.0
      %103 = vmatprep.subr.mxu0 0.0
      %104 = vmatpush1.msra.mxu0 0.0
      %105 = vmatprep.subr.mxu0 0.0
      %106 = vmatpush1.msra.mxu0 0.0
      %107 = vmatprep.subr.mxu0 0.0
      %108 = vmatpush1.msra.mxu0 0.0
      %109 = vmatprep.subr.mxu0 0.0
      %110 = vmatpush1.msra.mxu0 0.0
      %111 = vmatprep.subr.mxu0 0.0
      %112 = vmatpush1.msra.mxu0 0.0
      %113 = vmatprep.subr.mxu0 0.0
      %114 = vmatpush1.msra.mxu0 0.0
      %115 = vmatprep.subr.mxu0 0.0
      %116 = vmatpush1.msra.mxu0 0.0
      %117 = vmatprep.subr.mxu0 0.0
      %118 = vmatpush1.msra.mxu0 0.0
      %119 = vmatprep.subr.mxu0 0.0
      %120 = vmatpush1.msra.mxu0 %v87
      %121 = vmatprep.subr.mxu0 0.0
      %122 = vmatpush2.msra.mxu0 0.0
      %123 = vmatprep.subr.mxu0 0.0
      %124 = vmatpush2.msra.mxu0 0.0
      %125 = vmatprep.subr.mxu0 0.0
      %126 = vmatpush2.msra.mxu0 0.0
      %127 = vmatprep.subr.mxu0 0.0
      %128 = vmatpush2.msra.mxu0 0.0
      %129 = vmatprep.subr.mxu0 0.0
      %130 = vmatpush2.msra.mxu0 0.0
      %131 = vmatprep.subr.mxu0 0.0
      %132 = vmatpush2.msra.mxu0 0.0
      %133 = vmatprep.subr.mxu0 0.0
      %134 = vmatpush2.msra.mxu0 0.0
      %135 = vmatprep.subr.mxu0 0.0
      %136 = vmatpush2.msra.mxu0 0.0
      %137 = vmatprep.subr.mxu0 0.0
      %138 = vmatpush2.msra.mxu0 0.0
      %139 = vmatprep.subr.mxu0 0.0
      %140 = vmatpush2.msra.mxu0 0.0
      %141 = vmatprep.subr.mxu0 0.0
      %142 = vmatpush2.msra.mxu0 0.0
      %143 = vmatprep.subr.mxu0 0.0
      %144 = vmatpush2.msra.mxu0 0.0
      %145 = vmatprep.subr.mxu0 0.0
      %146 = vmatpush2.msra.mxu0 0.0
      %147 = vmatprep.subr.mxu0 0.0
      %148 = vmatpush2.msra.mxu0 0.0
      %149 = vmatprep.subr.mxu0 0.0
      %150 = vmatpush2.msra.mxu0 0.0
      %151 = vmatprep.subr.mxu0 0.0
      %152 = vmatpush2.msra.mxu0 0.0
      %153 = vmatprep.mubr.f32.mxu0 0.0
      %154 = vmatmul.mubr.f32.gmra.mxu0 %v83
      %v155 = vpop.f32.mrf.mxu0
      %v156 = vadd.f32 0.0, %v155
      %v157 = vpop.f32.mrf.mxu0
      %158 = vdwg.mxu0
      %v159 = vmax.f32 %v156, 0.0
      %v160 = vld [vmem:[%s2] sm:$0x3]
      %v161 = vld [vmem:[%s3] sm:$0x1]
      %v163 = vlaneseq
      %v164 = vshrl.u32 %v163, 7
      %v165 = vsub.s32 0, %v164
      %v166 = vrot.slane %v161, %v165
      %vm168 = vcmask 15360
      %v170 = vsel %vm168, %v159, 0
      %vm172 = vcmask 1041408
      %v174 = vsel %vm172, %v160, 0
      %176 = vmatprep.subr.mxu0 0.0
      %177 = vmatpush1.msra.mxu0 0.0
      %178 = vmatprep.subr.mxu0 0.0
      %179 = vmatpush1.msra.mxu0 0.0
      %180 = vmatprep.subr.mxu0 0.0
      %181 = vmatpush1.msra.mxu0 0.0
      %182 = vmatprep.subr.mxu0 0.0
      %183 = vmatpush1.msra.mxu0 0.0
      %184 = vmatprep.subr.mxu0 0.0
      %185 = vmatpush1.msra.mxu0 0.0
      %186 = vmatprep.subr.mxu0 0.0
      %187 = vmatpush1.msra.mxu0 0.0
      %188 = vmatprep.subr.mxu0 0.0
      %189 = vmatpush1.msra.mxu0 0.0
      %190 = vmatprep.subr.mxu0 0.0
      %191 = vmatpush1.msra.mxu0 0.0
      %192 = vmatprep.subr.mxu0 0.0
      %193 = vmatpush1.msra.mxu0 0.0
      %194 = vmatprep.subr.mxu0 0.0
      %195 = vmatpush1.msra.mxu0 0.0
      %196 = vmatprep.subr.mxu0 0.0
      %197 = vmatpush1.msra.mxu0 0.0
      %198 = vmatprep.subr.mxu0 0.0
      %199 = vmatpush1.msra.mxu0 0.0
      %200 = vmatprep.subr.mxu0 0.0
      %201 = vmatpush1.msra.mxu0 0.0
      %202 = vmatprep.subr.mxu0 0.0
      %203 = vmatpush1.msra.mxu0 0.0
      %204 = vmatprep.subr.mxu0 0.0
      %205 = vmatpush1.msra.mxu0 0.0
      %206 = vmatprep.subr.mxu0 0.0
      %207 = vmatpush1.msra.mxu0 %v174
      %208 = vmatprep.subr.mxu0 0.0
      %209 = vmatpush2.msra.mxu0 0.0
      %210 = vmatprep.subr.mxu0 0.0
      %211 = vmatpush2.msra.mxu0 0.0
      %212 = vmatprep.subr.mxu0 0.0
      %213 = vmatpush2.msra.mxu0 0.0
      %214 = vmatprep.subr.mxu0 0.0
      %215 = vmatpush2.msra.mxu0 0.0
      %216 = vmatprep.subr.mxu0 0.0
      %217 = vmatpush2.msra.mxu0 0.0
      %218 = vmatprep.subr.mxu0 0.0
      %219 = vmatpush2.msra.mxu0 0.0
      %220 = vmatprep.subr.mxu0 0.0
      %221 = vmatpush2.msra.mxu0 0.0
      %222 = vmatprep.subr.mxu0 0.0
      %223 = vmatpush2.msra.mxu0 0.0
      %224 = vmatprep.subr.mxu0 0.0
      %225 = vmatpush2.msra.mxu0 0.0
      %226 = vmatprep.subr.mxu0 0.0
      %227 = vmatpush2.msra.mxu0 0.0
      %228 = vmatprep.subr.mxu0 0.0
      %229 = vmatpush2.msra.mxu0 0.0
      %230 = vmatprep.subr.mxu0 0.0
      %231 = vmatpush2.msra.mxu0 0.0
      %232 = vmatprep.subr.mxu0 0.0
      %233 = vmatpush2.msra.mxu0 0.0
      %234 = vmatprep.subr.mxu0 0.0
      %235 = vmatpush2.msra.mxu0 0.0
      %236 = vmatprep.subr.mxu0 0.0
      %237 = vmatpush2.msra.mxu0 0.0
      %238 = vmatprep.subr.mxu0 0.0
      %239 = vmatpush2.msra.mxu0 0.0
      %240 = vmatprep.mubr.f32.mxu0 0.0
      %241 = vmatmul.mubr.f32.gmra.mxu0 %v170
      %v242 = vpop.f32.mrf.mxu0
      %v243 = vadd.f32 %v166, %v242
      %v244 = vpop.f32.mrf.mxu0
      %245 = vdwg.mxu0
      %247 = vrot.lane.b32.xlu0 %v243, 124
      %v248 = vpop.permute.xlu0 %247
      %250 = vrot.lane.b32.xlu0 %v243, 120
      %v251 = vpop.permute.xlu0 %250
      %253 = vrot.lane.b32.xlu0 %v243, 116
      %v254 = vpop.permute.xlu0 %253
      %v256 = vcombine.low %v243, %v251
      %v258 = vunpack.c.l.s4 1983009808
      %v259 = vunpack.c.0.s8 %v258
      %v260 = vlaneseq
      %v261 = vshrl.u32 %v260, 7
      %v262 = vsub.s32 %v259, %v261
      %v263 = vrot.slane %v256, %v262
      %v264 = vcombine.low %v248, %v254
      %v266 = vunpack.c.l.s4 1983009808
      %v267 = vunpack.c.0.s8 %v266
      %v268 = vlaneseq
      %v269 = vshrl.u32 %v268, 7
      %v270 = vsub.s32 %v267, %v269
      %v271 = vrot.slane %v264, %v270
      %v272 = vcombine.low %v263, %v271
      %v274 = vunpack.c.l.s4 1934713408
      %v275 = vunpack.c.0.s8 %v274
      %v276 = vlaneseq
      %v277 = vshrl.u32 %v276, 7
      %v278 = vsub.s32 %v275, %v277
      %v279 = vrot.slane %v272, %v278
      %v280 = vcombine.high %v279, 0.0
      %v281 = vmul.f32 %v279, 0.70710677
      %v282 = vmul.f32 %v280, 0.70710677
      %vm283 = vcmask 27648
      %v284 = vsel %vm283, %v281, -inf
      %v285 = vrot.slane %v284, 4
      %v286 = vmax.f32 %v284, %v285
      %v287 = vrot.slane %v286, 2
      %v288 = vmax.f32 %v286, %v287
      %v289 = vrot.slane %v288, 1
      %v290 = vmax.f32 %v288, %v289
      %v291 = vsel %vm283, %v282, -inf
      %v292 = vrot.slane %v291, 4
      %v293 = vmax.f32 %v291, %v292
      %v294 = vrot.slane %v293, 2
      %v295 = vmax.f32 %v293, %v294
      %v296 = vrot.slane %v295, 1
      %v297 = vmax.f32 %v295, %v296
      %v298 = vsub.f32 %v281, %v290
      %v299 = vsub.f32 %v282, %v297
      %v300 = vmul.f32 %v298, 1.442695
      %v301 = vpow.pop %v300
      %v302 = vmul.f32 %v299, 1.442695
      %v303 = vpow.pop %v302
      %v304 = vsel %vm283, %v301, 0.0
      %v305 = vrot.slane %v304, 4
      %v306 = vadd.f32 %v304, %v305
      %v307 = vrot.slane %v306, 2
      %v308 = vadd.f32 %v306, %v307
      %v309 = vrot.slane %v308, 1
      %v310 = vadd.f32 %v308, %v309
      %v311 = vsel %vm283, %v303, 0.0
      %v312 = vrot.slane %v311, 4
      %v313 = vadd.f32 %v311, %v312
      %v314 = vrot.slane %v313, 2
      %v315 = vadd.f32 %v313, %v314
      %v316 = vrot.slane %v315, 1
      %v317 = vadd.f32 %v315, %v316
      %v318 = vrcp.pop %v310
      %v319 = vmul.f32 %v301, %v318
      %v321 = vunpack.c.l.s4 1983009808
      %v322 = vunpack.c.0.s8 %v321
      %v323 = vlaneseq
      %v324 = vshrl.u32 %v323, 7
      %v325 = vsub.s32 %v322, %v324
      %v326 = vrot.slane %v319, %v325
      %v327 = vrcp.pop %v317
      %v328 = vmul.f32 %v303, %v327
      %v330 = vunpack.c.l.s4 1983009808
      %v331 = vunpack.c.0.s8 %v330
      %v332 = vlaneseq
      %v333 = vshrl.u32 %v332, 7
      %v334 = vsub.s32 %v331, %v333
      %v335 = vrot.slane %v328, %v334
      %v336 = vcombine.low %v326, %v335
      %v337 = vcombine.high %v326, %v335
      %v339 = vunpack.c.l.s4 1934713408
      %v340 = vunpack.c.0.s8 %v339
      %v341 = vlaneseq
      %v342 = vshrl.u32 %v341, 7
      %v343 = vsub.s32 %v340, %v342
      %v344 = vrot.slane %v336, %v343
      %v346 = vunpack.c.l.s4 1934713408
      %v347 = vunpack.c.0.s8 %v346
      %v348 = vlaneseq
      %v349 = vshrl.u32 %v348, 7
      %v350 = vsub.s32 %v347, %v349
      %v351 = vrot.slane %v337, %v350
      %v352 = vcombine.high %v344, 0.0
      %v353 = vcombine.high %v351, 0.0
      %355 = vrot.lane.b32.xlu0 %v352, 4
      %v356 = vpop.permute.xlu0 %355
      %359 = vrot.lane.b32.xlu0 %v351, 8
      %v360 = vpop.permute.xlu0 %359
      %363 = vrot.lane.b32.xlu0 %v353, 12
      %v364 = vpop.permute.xlu0 %363
      %v366 = vsel %vm82, %v344, %v356
      %vm367 = vcmask 64512
      %v368 = vsel %vm367, %v366, %v360
      %vm369 = vcmask 97280
      %v370 = vsel %vm369, %v368, %v364
      %vm371 = vcmask 123904
      %372 = vst.msk [vmem:[#allocation6] sm:$0x3] %vm371, %v370
    $region29: #{tpu_custom_call.1} parent=1 // pred_fallthru
      _
    // Predicated region
    $region30: #{tpu_custom_call.1} parent=1 // pred_check
      _
    $region31: #{tpu_custom_call.1} parent=1 // pred_check_branch
      %374 = sbr.rel (0) target = $region33
    $region32: #{tpu_custom_call.1} parent=1 // pred_region
      %s376 = ssub.s32 32, 32
      %377 = vsyncadd [#allocation5], %s376
      %s379 = sshll.u32 [#allocation6], 4
      %s380 = int_to_ptr.vmem [resolvable:$true] %s379
      %382 = dma.vmem_to_hbm [thread:$0]  %s380, 32, %s4, [#allocation5]
    $region33: #{tpu_custom_call.1} parent=1 // pred_fallthru
      _
    // Predicated region
    $region34: #{tpu_custom_call.1} parent=1 // pred_check
      _
    $region35: #{tpu_custom_call.1} parent=1 // pred_check_branch
      %384 = sbr.rel (0) target = $region37
    $region36: #{tpu_custom_call.1} parent=1 // pred_region
      %385 = dma.done [#allocation5], 32
    $region37: #{tpu_custom_call.1} parent=1 // pred_fallthru
      _
    %386 = vsyncpa [#allocation4], 1
    %387 = vsyncpa [#allocation5], 1

</llo_original>
